<compile_context>
chip_gen: v5e
topology: v5e:2x2
jax: 0.10.0
libtpu: 0.0.40
codegen_flags: <defaults>
</compile_context>

<pallas_src>
import jax
import jax.numpy as jnp
import numpy as np
from jax import lax
from jax.experimental import pallas as pl
from jax.experimental.pallas import tpu as pltpu


def _rnn_kernel(x2d_ref, mask_ref, wih_ref, whh_ref, bias_ref, out_ref, xp_ref, h_ref):
    """Vanilla tanh-RNN recurrence, whole (small) problem resident in VMEM.

    x2d_ref:  [T*Bpad, D]  time-major input, flattened (row index = t*Bpad + b)
    mask_ref: [T*Bpad, 1]  f32 validity (1 on valid rows, 0 on padded time/batch rows)
    wih_ref:  [D, H]       W_ih^T
    whh_ref:  [H, H]       W_hh^T
    bias_ref: [1, H]       b_ih + b_hh (folded)
    out_ref:  [T*Bpad, H]  output (write-only; single bulk store)
    xp_ref:   [T*Bpad, H]  VMEM scratch: projected input, overwritten in place by
                           the unmasked hidden states as each row is consumed
    h_ref:    [Bpad, H]    hidden-state scratch (VMEM)
    """
    Bpad = h_ref.shape[0]
    T = xp_ref.shape[0] // Bpad

    # (1) Hoisted input projection + folded bias: one batched MXU matmul over all
    #     timesteps, completely off the serial recurrence path.  Staged in xp_ref
    #     so out_ref stays write-only.
    xp_ref[...] = (
        jnp.dot(x2d_ref[...], wih_ref[...], preferred_element_type=jnp.float32)
        + bias_ref[...]
    )

    h_ref[...] = jnp.zeros_like(h_ref)

    # (2) Serial recurrence.  Python loop over a static, small T -> fully unrolled
    #     with static 8-aligned row offsets: every xp load / h store is an aligned
    #     full-sublane tile access and trivially disambiguated (step t only touches
    #     rows [t*Bpad, (t+1)*Bpad)).  Per step only xp[t] + h @ W_hh^T -> tanh.
    for t in range(T):
        row = t * Bpad
        pre = xp_ref[row:row + Bpad, :] + jnp.dot(
            h_ref[...], whh_ref[...], preferred_element_type=jnp.float32
        )
        h_new = jnp.tanh(pre)
        h_ref[...] = h_new
        # Reuse the consumed xp rows to stage the unmasked hidden state (side write,
        # off the h dependency chain).
        xp_ref[row:row + Bpad, :] = h_new

    # (3) Bulk masking (pad_packed_sequence padding_value=0) + the single write-only
    #     output store.  The mask is a contiguous per-row prefix, so valid positions
    #     never depended on padded steps; no gating was needed inside the loop.
    out_ref[...] = xp_ref[...] * mask_ref[...]


@jax.jit
def rnn_wrapper_forward(x, mask, w_ih, w_hh, b_ih, b_hh):
    """x: [B, T, D] float32, mask: [B, T] (0/1). Returns [B, T, H] float32."""
    B, T, D = x.shape
    H = w_hh.shape[0]
    Bpad = ((B + 7) // 8) * 8  # pad batch to the sublane granule

    lengths = jnp.sum(mask.astype(jnp.int32), axis=1)                 # [B]

    # time-major, batch padded to Bpad, flattened so the kernel only ever does
    # aligned contiguous sublane slices.
    x_tm = jnp.transpose(x, (1, 0, 2))                                 # [T, B, D]
    x_tm = jnp.pad(x_tm, ((0, 0), (0, Bpad - B), (0, 0)))              # [T, Bpad, D]
    x2d = x_tm.reshape(T * Bpad, D)                                    # [T*Bpad, D]

    # Precomputed time-major validity column (padded batch rows get length 0).
    len_pad = jnp.pad(lengths, (0, Bpad - B))                          # [Bpad]
    valid = (jnp.arange(T)[:, None] < len_pad[None, :]).astype(jnp.float32)
    valid2d = valid.reshape(T * Bpad, 1)                               # [T*Bpad, 1]

    wih_t = jnp.transpose(w_ih)                                        # [D, H]
    whh_t = jnp.transpose(w_hh)                                        # [H, H]
    bias = (b_ih + b_hh)[None, :]                                      # [1, H] folded

    out2d = pl.pallas_call(
        _rnn_kernel,
        out_shape=jax.ShapeDtypeStruct((T * Bpad, H), jnp.float32),
        grid=(1,),
        in_specs=[
            pl.BlockSpec((T * Bpad, D), lambda i: (0, 0)),
            pl.BlockSpec((T * Bpad, 1), lambda i: (0, 0)),
            pl.BlockSpec((D, H), lambda i: (0, 0)),
            pl.BlockSpec((H, H), lambda i: (0, 0)),
            pl.BlockSpec((1, H), lambda i: (0, 0)),
        ],
        out_specs=pl.BlockSpec((T * Bpad, H), lambda i: (0, 0)),
        scratch_shapes=[
            pltpu.VMEM((T * Bpad, H), jnp.float32),   # xp / unmasked-h staging
            pltpu.VMEM((Bpad, H), jnp.float32),       # hidden state
        ],
        compiler_params=pltpu.CompilerParams(
            dimension_semantics=("arbitrary",),
        ),
    )(x2d, valid2d, wih_t, whh_t, bias)

    out = out2d.reshape(T, Bpad, H)[:, :B, :]                          # drop batch pad
    return jnp.transpose(out, (1, 0, 2))                               # [B, T, H]


def _reference_forward(x, mask, w_ih, w_hh, b_ih, b_hh):
    """Pure-JAX reference of the same semantics (for correctness check)."""
    B, T, D = x.shape
    H = w_hh.shape[0]
    m = mask.astype(jnp.float32)

    def step(h, inputs):
        x_t, m_t = inputs                      # [B, D], [B]
        pre = x_t @ w_ih.T + b_ih + h @ w_hh.T + b_hh
        h_new = jnp.tanh(pre)
        m_col = m_t[:, None]
        h_next = jnp.where(m_col > 0, h_new, h)
        return h_next, h_new * m_col

    h0 = jnp.zeros((B, H), jnp.float32)
    _, ys = lax.scan(step, h0, (jnp.swapaxes(x, 0, 1), jnp.swapaxes(m, 0, 1)))
    return jnp.swapaxes(ys, 0, 1)


if __name__ == "__main__":
    # Small shapes implied by the forward: x [B, T, D], mask [B, T]; RNN hidden H.
    B, T, D, H = 2, 8, 16, 32

    key = jax.random.PRNGKey(0)
    kx, kwih, kwhh, kbih, kbhh = jax.random.split(key, 5)

    x = jax.random.normal(kx, (B, T, D), dtype=jnp.float32)

    # lengths = [8, 5]: one full-length sequence so max(lengths) == T (matches
    # pad_packed_sequence's output time dimension).
    lengths = jnp.array([8, 5], dtype=jnp.int32)
    mask = (jnp.arange(T)[None, :] < lengths[:, None]).astype(jnp.float32)  # [B, T]

    # Deterministic parameter init, matching nn.RNN(D, H) uniform(-1/sqrt(H), 1/sqrt(H)).
    bound = 1.0 / np.sqrt(H)
    w_ih = jax.random.uniform(kwih, (H, D), jnp.float32, -bound, bound)
    w_hh = jax.random.uniform(kwhh, (H, H), jnp.float32, -bound, bound)
    b_ih = jax.random.uniform(kbih, (H,), jnp.float32, -bound, bound)
    b_hh = jax.random.uniform(kbhh, (H,), jnp.float32, -bound, bound)

    out = rnn_wrapper_forward(x, mask, w_ih, w_hh, b_ih, b_hh)
    out = jax.block_until_ready(out)

    ref = _reference_forward(x, mask, w_ih, w_hh, b_ih, b_hh)
    np.testing.assert_allclose(np.asarray(out), np.asarray(ref), rtol=1e-5, atol=1e-5)

    assert out.shape == (B, T, H)
    print("KERNEL_OK")
</pallas_src>

<mosaic_0001>
module attributes {stable_mosaic.version = 11 : i64} {
  func.func @_rnn_kernel(%arg0: i32, %arg1: memref<64x16xf32, #tpu.memory_space<vmem>>, %arg2: memref<64x1xf32, #tpu.memory_space<vmem>>, %arg3: memref<16x32xf32, #tpu.memory_space<vmem>>, %arg4: memref<32x32xf32, #tpu.memory_space<vmem>>, %arg5: memref<1x32xf32, #tpu.memory_space<vmem>>, %arg6: memref<64x32xf32, #tpu.memory_space<vmem>>, %arg7: memref<64x32xf32, #tpu.memory_space<vmem>>, %arg8: memref<8x32xf32, #tpu.memory_space<vmem>>) attributes {dimension_semantics = [#tpu.dimension_semantics<arbitrary>], iteration_bounds = array<i64: 1>, scalar_prefetch = 0 : i64, scratch_operands = 2 : i64, tpu.core_type = #tpu.core_type<tc>, window_params = [{pipeline_mode = #tpu.pipeline_mode<synchronous>, transform_indices = @transform_0, window_bounds = array<i64: 64, 16>}, {pipeline_mode = #tpu.pipeline_mode<synchronous>, transform_indices = @transform_1, window_bounds = array<i64: 64, 1>}, {pipeline_mode = #tpu.pipeline_mode<synchronous>, transform_indices = @transform_2, window_bounds = array<i64: 16, 32>}, {pipeline_mode = #tpu.pipeline_mode<synchronous>, transform_indices = @transform_3, window_bounds = array<i64: 32, 32>}, {pipeline_mode = #tpu.pipeline_mode<synchronous>, transform_indices = @transform_4, window_bounds = array<i64: 1, 32>}, {pipeline_mode = #tpu.pipeline_mode<synchronous>, transform_indices = @transform_5, window_bounds = array<i64: 64, 32>}]} {
    %c0 = arith.constant 0 : index
    %c0_0 = arith.constant 0 : index
    %0 = vector.load %arg1[%c0, %c0_0] : memref<64x16xf32, #tpu.memory_space<vmem>>, vector<64x16xf32>
    %c0_1 = arith.constant 0 : index
    %c0_2 = arith.constant 0 : index
    %1 = vector.load %arg3[%c0_1, %c0_2] : memref<16x32xf32, #tpu.memory_space<vmem>>, vector<16x32xf32>
    %cst = arith.constant dense<0.000000e+00> : vector<64x32xf32>
    %2 = tpu.matmul %0, %1, %cst {dimension_numbers = #tpu.dot_dimension_numbers<[1], [0], [0], [1], [0, 0, 1, 1], [], []>} : vector<64x16xf32>, vector<16x32xf32>, vector<64x32xf32> -> vector<64x32xf32>
    %c0_3 = arith.constant 0 : index
    %c0_4 = arith.constant 0 : index
    %3 = vector.load %arg5[%c0_3, %c0_4] : memref<1x32xf32, #tpu.memory_space<vmem>>, vector<1x32xf32>
    %4 = vector.broadcast %3 : vector<1x32xf32> to vector<64x32xf32>
    %5 = arith.addf %2, %4 : vector<64x32xf32>
    %c0_5 = arith.constant 0 : index
    %c0_6 = arith.constant 0 : index
    %6 = vector.load %arg7[%c0_5, %c0_6] : memref<64x32xf32, #tpu.memory_space<vmem>>, vector<64x32xf32>
    tpu.vector_store %arg7[%c0_5, %c0_6], %5 {strides = array<i32>} : memref<64x32xf32, #tpu.memory_space<vmem>>, vector<64x32xf32>,
    %cst_7 = arith.constant 0.000000e+00 : f32
    %7 = vector.broadcast %cst_7 : f32 to vector<8x32xf32>
    %c0_8 = arith.constant 0 : index
    %c0_9 = arith.constant 0 : index
    %8 = vector.load %arg8[%c0_8, %c0_9] : memref<8x32xf32, #tpu.memory_space<vmem>>, vector<8x32xf32>
    tpu.vector_store %arg8[%c0_8, %c0_9], %7 {strides = array<i32>} : memref<8x32xf32, #tpu.memory_space<vmem>>, vector<8x32xf32>,
    %c0_10 = arith.constant 0 : index
    %c0_11 = arith.constant 0 : index
    %9 = vector.load %arg7[%c0_10, %c0_11] : memref<64x32xf32, #tpu.memory_space<vmem>>, vector<8x32xf32>
    %c0_12 = arith.constant 0 : index
    %c0_13 = arith.constant 0 : index
    %10 = vector.load %arg8[%c0_12, %c0_13] : memref<8x32xf32, #tpu.memory_space<vmem>>, vector<8x32xf32>
    %c0_14 = arith.constant 0 : index
    %c0_15 = arith.constant 0 : index
    %11 = vector.load %arg4[%c0_14, %c0_15] : memref<32x32xf32, #tpu.memory_space<vmem>>, vector<32x32xf32>
    %cst_16 = arith.constant dense<0.000000e+00> : vector<8x32xf32>
    %12 = tpu.matmul %10, %11, %cst_16 {dimension_numbers = #tpu.dot_dimension_numbers<[1], [0], [0], [1], [0, 0, 1, 1], [], []>} : vector<8x32xf32>, vector<32x32xf32>, vector<8x32xf32> -> vector<8x32xf32>
    %13 = arith.addf %9, %12 : vector<8x32xf32>
    %14 = math.tanh %13 : vector<8x32xf32>
    %c0_17 = arith.constant 0 : index
    %c0_18 = arith.constant 0 : index
    %15 = vector.load %arg8[%c0_17, %c0_18] : memref<8x32xf32, #tpu.memory_space<vmem>>, vector<8x32xf32>
    tpu.vector_store %arg8[%c0_17, %c0_18], %14 {strides = array<i32>} : memref<8x32xf32, #tpu.memory_space<vmem>>, vector<8x32xf32>,
    %c0_19 = arith.constant 0 : index
    %c0_20 = arith.constant 0 : index
    %16 = vector.load %arg7[%c0_19, %c0_20] : memref<64x32xf32, #tpu.memory_space<vmem>>, vector<8x32xf32>
    tpu.vector_store %arg7[%c0_19, %c0_20], %14 {strides = array<i32>} : memref<64x32xf32, #tpu.memory_space<vmem>>, vector<8x32xf32>,
    %c8 = arith.constant 8 : index
    %c0_21 = arith.constant 0 : index
    %17 = vector.load %arg7[%c8, %c0_21] : memref<64x32xf32, #tpu.memory_space<vmem>>, vector<8x32xf32>
    %c0_22 = arith.constant 0 : index
    %c0_23 = arith.constant 0 : index
    %18 = vector.load %arg8[%c0_22, %c0_23] : memref<8x32xf32, #tpu.memory_space<vmem>>, vector<8x32xf32>
    %c0_24 = arith.constant 0 : index
    %c0_25 = arith.constant 0 : index
    %19 = vector.load %arg4[%c0_24, %c0_25] : memref<32x32xf32, #tpu.memory_space<vmem>>, vector<32x32xf32>
    %cst_26 = arith.constant dense<0.000000e+00> : vector<8x32xf32>
    %20 = tpu.matmul %18, %19, %cst_26 {dimension_numbers = #tpu.dot_dimension_numbers<[1], [0], [0], [1], [0, 0, 1, 1], [], []>} : vector<8x32xf32>, vector<32x32xf32>, vector<8x32xf32> -> vector<8x32xf32>
    %21 = arith.addf %17, %20 : vector<8x32xf32>
    %22 = math.tanh %21 : vector<8x32xf32>
    %c0_27 = arith.constant 0 : index
    %c0_28 = arith.constant 0 : index
    %23 = vector.load %arg8[%c0_27, %c0_28] : memref<8x32xf32, #tpu.memory_space<vmem>>, vector<8x32xf32>
    tpu.vector_store %arg8[%c0_27, %c0_28], %22 {strides = array<i32>} : memref<8x32xf32, #tpu.memory_space<vmem>>, vector<8x32xf32>,
    %c8_29 = arith.constant 8 : index
    %c0_30 = arith.constant 0 : index
    %24 = vector.load %arg7[%c8_29, %c0_30] : memref<64x32xf32, #tpu.memory_space<vmem>>, vector<8x32xf32>
    tpu.vector_store %arg7[%c8_29, %c0_30], %22 {strides = array<i32>} : memref<64x32xf32, #tpu.memory_space<vmem>>, vector<8x32xf32>,
    %c16 = arith.constant 16 : index
    %c0_31 = arith.constant 0 : index
    %25 = vector.load %arg7[%c16, %c0_31] : memref<64x32xf32, #tpu.memory_space<vmem>>, vector<8x32xf32>
    %c0_32 = arith.constant 0 : index
    %c0_33 = arith.constant 0 : index
    %26 = vector.load %arg8[%c0_32, %c0_33] : memref<8x32xf32, #tpu.memory_space<vmem>>, vector<8x32xf32>
    %c0_34 = arith.constant 0 : index
    %c0_35 = arith.constant 0 : index
    %27 = vector.load %arg4[%c0_34, %c0_35] : memref<32x32xf32, #tpu.memory_space<vmem>>, vector<32x32xf32>
    %cst_36 = arith.constant dense<0.000000e+00> : vector<8x32xf32>
    %28 = tpu.matmul %26, %27, %cst_36 {dimension_numbers = #tpu.dot_dimension_numbers<[1], [0], [0], [1], [0, 0, 1, 1], [], []>} : vector<8x32xf32>, vector<32x32xf32>, vector<8x32xf32> -> vector<8x32xf32>
    %29 = arith.addf %25, %28 : vector<8x32xf32>
    %30 = math.tanh %29 : vector<8x32xf32>
    %c0_37 = arith.constant 0 : index
    %c0_38 = arith.constant 0 : index
    %31 = vector.load %arg8[%c0_37, %c0_38] : memref<8x32xf32, #tpu.memory_space<vmem>>, vector<8x32xf32>
    tpu.vector_store %arg8[%c0_37, %c0_38], %30 {strides = array<i32>} : memref<8x32xf32, #tpu.memory_space<vmem>>, vector<8x32xf32>,
    %c16_39 = arith.constant 16 : index
    %c0_40 = arith.constant 0 : index
    %32 = vector.load %arg7[%c16_39, %c0_40] : memref<64x32xf32, #tpu.memory_space<vmem>>, vector<8x32xf32>
    tpu.vector_store %arg7[%c16_39, %c0_40], %30 {strides = array<i32>} : memref<64x32xf32, #tpu.memory_space<vmem>>, vector<8x32xf32>,
    %c24 = arith.constant 24 : index
    %c0_41 = arith.constant 0 : index
    %33 = vector.load %arg7[%c24, %c0_41] : memref<64x32xf32, #tpu.memory_space<vmem>>, vector<8x32xf32>
    %c0_42 = arith.constant 0 : index
    %c0_43 = arith.constant 0 : index
    %34 = vector.load %arg8[%c0_42, %c0_43] : memref<8x32xf32, #tpu.memory_space<vmem>>, vector<8x32xf32>
    %c0_44 = arith.constant 0 : index
    %c0_45 = arith.constant 0 : index
    %35 = vector.load %arg4[%c0_44, %c0_45] : memref<32x32xf32, #tpu.memory_space<vmem>>, vector<32x32xf32>
    %cst_46 = arith.constant dense<0.000000e+00> : vector<8x32xf32>
    %36 = tpu.matmul %34, %35, %cst_46 {dimension_numbers = #tpu.dot_dimension_numbers<[1], [0], [0], [1], [0, 0, 1, 1], [], []>} : vector<8x32xf32>, vector<32x32xf32>, vector<8x32xf32> -> vector<8x32xf32>
    %37 = arith.addf %33, %36 : vector<8x32xf32>
    %38 = math.tanh %37 : vector<8x32xf32>
    %c0_47 = arith.constant 0 : index
    %c0_48 = arith.constant 0 : index
    %39 = vector.load %arg8[%c0_47, %c0_48] : memref<8x32xf32, #tpu.memory_space<vmem>>, vector<8x32xf32>
    tpu.vector_store %arg8[%c0_47, %c0_48], %38 {strides = array<i32>} : memref<8x32xf32, #tpu.memory_space<vmem>>, vector<8x32xf32>,
    %c24_49 = arith.constant 24 : index
    %c0_50 = arith.constant 0 : index
    %40 = vector.load %arg7[%c24_49, %c0_50] : memref<64x32xf32, #tpu.memory_space<vmem>>, vector<8x32xf32>
    tpu.vector_store %arg7[%c24_49, %c0_50], %38 {strides = array<i32>} : memref<64x32xf32, #tpu.memory_space<vmem>>, vector<8x32xf32>,
    %c32 = arith.constant 32 : index
    %c0_51 = arith.constant 0 : index
    %41 = vector.load %arg7[%c32, %c0_51] : memref<64x32xf32, #tpu.memory_space<vmem>>, vector<8x32xf32>
    %c0_52 = arith.constant 0 : index
    %c0_53 = arith.constant 0 : index
    %42 = vector.load %arg8[%c0_52, %c0_53] : memref<8x32xf32, #tpu.memory_space<vmem>>, vector<8x32xf32>
    %c0_54 = arith.constant 0 : index
    %c0_55 = arith.constant 0 : index
    %43 = vector.load %arg4[%c0_54, %c0_55] : memref<32x32xf32, #tpu.memory_space<vmem>>, vector<32x32xf32>
    %cst_56 = arith.constant dense<0.000000e+00> : vector<8x32xf32>
    %44 = tpu.matmul %42, %43, %cst_56 {dimension_numbers = #tpu.dot_dimension_numbers<[1], [0], [0], [1], [0, 0, 1, 1], [], []>} : vector<8x32xf32>, vector<32x32xf32>, vector<8x32xf32> -> vector<8x32xf32>
    %45 = arith.addf %41, %44 : vector<8x32xf32>
    %46 = math.tanh %45 : vector<8x32xf32>
    %c0_57 = arith.constant 0 : index
    %c0_58 = arith.constant 0 : index
    %47 = vector.load %arg8[%c0_57, %c0_58] : memref<8x32xf32, #tpu.memory_space<vmem>>, vector<8x32xf32>
    tpu.vector_store %arg8[%c0_57, %c0_58], %46 {strides = array<i32>} : memref<8x32xf32, #tpu.memory_space<vmem>>, vector<8x32xf32>,
    %c32_59 = arith.constant 32 : index
    %c0_60 = arith.constant 0 : index
    %48 = vector.load %arg7[%c32_59, %c0_60] : memref<64x32xf32, #tpu.memory_space<vmem>>, vector<8x32xf32>
    tpu.vector_store %arg7[%c32_59, %c0_60], %46 {strides = array<i32>} : memref<64x32xf32, #tpu.memory_space<vmem>>, vector<8x32xf32>,
    %c40 = arith.constant 40 : index
    %c0_61 = arith.constant 0 : index
    %49 = vector.load %arg7[%c40, %c0_61] : memref<64x32xf32, #tpu.memory_space<vmem>>, vector<8x32xf32>
    %c0_62 = arith.constant 0 : index
    %c0_63 = arith.constant 0 : index
    %50 = vector.load %arg8[%c0_62, %c0_63] : memref<8x32xf32, #tpu.memory_space<vmem>>, vector<8x32xf32>
    %c0_64 = arith.constant 0 : index
    %c0_65 = arith.constant 0 : index
    %51 = vector.load %arg4[%c0_64, %c0_65] : memref<32x32xf32, #tpu.memory_space<vmem>>, vector<32x32xf32>
    %cst_66 = arith.constant dense<0.000000e+00> : vector<8x32xf32>
    %52 = tpu.matmul %50, %51, %cst_66 {dimension_numbers = #tpu.dot_dimension_numbers<[1], [0], [0], [1], [0, 0, 1, 1], [], []>} : vector<8x32xf32>, vector<32x32xf32>, vector<8x32xf32> -> vector<8x32xf32>
    %53 = arith.addf %49, %52 : vector<8x32xf32>
    %54 = math.tanh %53 : vector<8x32xf32>
    %c0_67 = arith.constant 0 : index
    %c0_68 = arith.constant 0 : index
    %55 = vector.load %arg8[%c0_67, %c0_68] : memref<8x32xf32, #tpu.memory_space<vmem>>, vector<8x32xf32>
    tpu.vector_store %arg8[%c0_67, %c0_68], %54 {strides = array<i32>} : memref<8x32xf32, #tpu.memory_space<vmem>>, vector<8x32xf32>,
    %c40_69 = arith.constant 40 : index
    %c0_70 = arith.constant 0 : index
    %56 = vector.load %arg7[%c40_69, %c0_70] : memref<64x32xf32, #tpu.memory_space<vmem>>, vector<8x32xf32>
    tpu.vector_store %arg7[%c40_69, %c0_70], %54 {strides = array<i32>} : memref<64x32xf32, #tpu.memory_space<vmem>>, vector<8x32xf32>,
    %c48 = arith.constant 48 : index
    %c0_71 = arith.constant 0 : index
    %57 = vector.load %arg7[%c48, %c0_71] : memref<64x32xf32, #tpu.memory_space<vmem>>, vector<8x32xf32>
    %c0_72 = arith.constant 0 : index
    %c0_73 = arith.constant 0 : index
    %58 = vector.load %arg8[%c0_72, %c0_73] : memref<8x32xf32, #tpu.memory_space<vmem>>, vector<8x32xf32>
    %c0_74 = arith.constant 0 : index
    %c0_75 = arith.constant 0 : index
    %59 = vector.load %arg4[%c0_74, %c0_75] : memref<32x32xf32, #tpu.memory_space<vmem>>, vector<32x32xf32>
    %cst_76 = arith.constant dense<0.000000e+00> : vector<8x32xf32>
    %60 = tpu.matmul %58, %59, %cst_76 {dimension_numbers = #tpu.dot_dimension_numbers<[1], [0], [0], [1], [0, 0, 1, 1], [], []>} : vector<8x32xf32>, vector<32x32xf32>, vector<8x32xf32> -> vector<8x32xf32>
    %61 = arith.addf %57, %60 : vector<8x32xf32>
    %62 = math.tanh %61 : vector<8x32xf32>
    %c0_77 = arith.constant 0 : index
    %c0_78 = arith.constant 0 : index
    %63 = vector.load %arg8[%c0_77, %c0_78] : memref<8x32xf32, #tpu.memory_space<vmem>>, vector<8x32xf32>
    tpu.vector_store %arg8[%c0_77, %c0_78], %62 {strides = array<i32>} : memref<8x32xf32, #tpu.memory_space<vmem>>, vector<8x32xf32>,
    %c48_79 = arith.constant 48 : index
    %c0_80 = arith.constant 0 : index
    %64 = vector.load %arg7[%c48_79, %c0_80] : memref<64x32xf32, #tpu.memory_space<vmem>>, vector<8x32xf32>
    tpu.vector_store %arg7[%c48_79, %c0_80], %62 {strides = array<i32>} : memref<64x32xf32, #tpu.memory_space<vmem>>, vector<8x32xf32>,
    %c56 = arith.constant 56 : index
    %c0_81 = arith.constant 0 : index
    %65 = vector.load %arg7[%c56, %c0_81] : memref<64x32xf32, #tpu.memory_space<vmem>>, vector<8x32xf32>
    %c0_82 = arith.constant 0 : index
    %c0_83 = arith.constant 0 : index
    %66 = vector.load %arg8[%c0_82, %c0_83] : memref<8x32xf32, #tpu.memory_space<vmem>>, vector<8x32xf32>
    %c0_84 = arith.constant 0 : index
    %c0_85 = arith.constant 0 : index
    %67 = vector.load %arg4[%c0_84, %c0_85] : memref<32x32xf32, #tpu.memory_space<vmem>>, vector<32x32xf32>
    %cst_86 = arith.constant dense<0.000000e+00> : vector<8x32xf32>
    %68 = tpu.matmul %66, %67, %cst_86 {dimension_numbers = #tpu.dot_dimension_numbers<[1], [0], [0], [1], [0, 0, 1, 1], [], []>} : vector<8x32xf32>, vector<32x32xf32>, vector<8x32xf32> -> vector<8x32xf32>
    %69 = arith.addf %65, %68 : vector<8x32xf32>
    %70 = math.tanh %69 : vector<8x32xf32>
    %c0_87 = arith.constant 0 : index
    %c0_88 = arith.constant 0 : index
    %71 = vector.load %arg8[%c0_87, %c0_88] : memref<8x32xf32, #tpu.memory_space<vmem>>, vector<8x32xf32>
    tpu.vector_store %arg8[%c0_87, %c0_88], %70 {strides = array<i32>} : memref<8x32xf32, #tpu.memory_space<vmem>>, vector<8x32xf32>,
    %c56_89 = arith.constant 56 : index
    %c0_90 = arith.constant 0 : index
    %72 = vector.load %arg7[%c56_89, %c0_90] : memref<64x32xf32, #tpu.memory_space<vmem>>, vector<8x32xf32>
    tpu.vector_store %arg7[%c56_89, %c0_90], %70 {strides = array<i32>} : memref<64x32xf32, #tpu.memory_space<vmem>>, vector<8x32xf32>,
    %c0_91 = arith.constant 0 : index
    %c0_92 = arith.constant 0 : index
    %73 = vector.load %arg7[%c0_91, %c0_92] : memref<64x32xf32, #tpu.memory_space<vmem>>, vector<64x32xf32>
    %c0_93 = arith.constant 0 : index
    %c0_94 = arith.constant 0 : index
    %74 = vector.load %arg2[%c0_93, %c0_94] : memref<64x1xf32, #tpu.memory_space<vmem>>, vector<64x1xf32>
    %75 = vector.broadcast %74 : vector<64x1xf32> to vector<64x32xf32>
    %76 = arith.mulf %73, %75 : vector<64x32xf32>
    %c0_95 = arith.constant 0 : index
    %c0_96 = arith.constant 0 : index
    %77 = vector.load %arg6[%c0_95, %c0_96] : memref<64x32xf32, #tpu.memory_space<vmem>>, vector<64x32xf32>
    tpu.vector_store %arg6[%c0_95, %c0_96], %76 {strides = array<i32>} : memref<64x32xf32, #tpu.memory_space<vmem>>, vector<64x32xf32>,
    return
  }
  func.func @transform_0(%arg0: i32) -> (i32, i32) {
    %c0_i32 = arith.constant 0 : i32
    %c0_i32_0 = arith.constant 0 : i32
    %c0_i32_1 = arith.constant 0 : i32
    return %c0_i32, %c0_i32_0 : i32, i32
  }
  func.func @transform_1(%arg0: i32) -> (i32, i32) {
    %c0_i32 = arith.constant 0 : i32
    %c0_i32_0 = arith.constant 0 : i32
    %c0_i32_1 = arith.constant 0 : i32
    return %c0_i32, %c0_i32_0 : i32, i32
  }
  func.func @transform_2(%arg0: i32) -> (i32, i32) {
    %c0_i32 = arith.constant 0 : i32
    %c0_i32_0 = arith.constant 0 : i32
    %c0_i32_1 = arith.constant 0 : i32
    return %c0_i32, %c0_i32_0 : i32, i32
  }
  func.func @transform_3(%arg0: i32) -> (i32, i32) {
    %c0_i32 = arith.constant 0 : i32
    %c0_i32_0 = arith.constant 0 : i32
    %c0_i32_1 = arith.constant 0 : i32
    return %c0_i32, %c0_i32_0 : i32, i32
  }
  func.func @transform_4(%arg0: i32) -> (i32, i32) {
    %c0_i32 = arith.constant 0 : i32
    %c0_i32_0 = arith.constant 0 : i32
    %c0_i32_1 = arith.constant 0 : i32
    return %c0_i32, %c0_i32_0 : i32, i32
  }
  func.func @transform_5(%arg0: i32) -> (i32, i32) {
    %c0_i32 = arith.constant 0 : i32
    %c0_i32_0 = arith.constant 0 : i32
    %c0_i32_1 = arith.constant 0 : i32
    return %c0_i32, %c0_i32_0 : i32, i32
  }
}

</mosaic_0001>

<llo_original>
// kernel: rnn_wrapper_forward.1
$region0: #{rnn_wrapper_forward.1}
  #allocation0 [shape = 'u32[]', space=smem, size = 0x4, offset = 0x4, fixed_abs, tag = 'smem constant byte address 0x4 - core index']
  #allocation1 [shape = 'u32[72,128]{1,0:T(1,128)}', space=vmem, size = 0x9000, scoped, tag = 'internal scratch']
  #allocation2 [shape = 'f32[64,32]{1,0:T(8,128)}', space=vmem, size = 0x8000, scoped, tag = 'scratch operand']
  #allocation3 [shape = 'f32[8,32]{1,0:T(8,128)}', space=vmem, size = 0x1000, scoped, tag = 'scratch operand']
  %s0 = inlined_call_operand.vmem [shape: f32[64,16], index: 0, kind: input, shape index: {}]
  %s1 = inlined_call_operand.vmem [shape: f32[64,1], index: 1, kind: input, shape index: {}]
  %s2 = inlined_call_operand.vmem [shape: f32[16,32], index: 2, kind: input, shape index: {}]
  %s3 = inlined_call_operand.vmem [shape: f32[32,32], index: 3, kind: input, shape index: {}]
  %s4 = inlined_call_operand.vmem [shape: f32[1,32], index: 4, kind: input, shape index: {}]
  %s5 = inlined_call_operand.vmem [shape: f32[64,32], index: 5, kind: output, shape index: {}]
  %s6 = sld [smem:[#allocation0]]
  $region30: #{rnn_wrapper_forward.1} parent=0
    _
  %s8 = ssub.s32 1, %s6
  %s9 = scalar_select 0, %s8, %s6
  // Predicated region
  $region2: #{rnn_wrapper_forward.1} parent=0 // pred_check
    _
  $region3: #{rnn_wrapper_forward.1} parent=0 // pred_check_branch
    %11 = sbr.rel (0) target = $region5
  $region4: #{rnn_wrapper_forward.1} parent=0 // pred_region
    _
  $region5: #{rnn_wrapper_forward.1} parent=0 // pred_fallthru
    _
  // Predicated region
  $region6: #{rnn_wrapper_forward.1} parent=0 // pred_check
    _
  $region7: #{rnn_wrapper_forward.1} parent=0 // pred_check_branch
    %13 = sbr.rel (0) target = $region9
  $region8: #{rnn_wrapper_forward.1} parent=0 // pred_region
    _
  $region9: #{rnn_wrapper_forward.1} parent=0 // pred_fallthru
    _
  // Predicated region
  $region10: #{rnn_wrapper_forward.1} parent=0 // pred_check
    _
  $region11: #{rnn_wrapper_forward.1} parent=0 // pred_check_branch
    %15 = sbr.rel (0) target = $region13
  $region12: #{rnn_wrapper_forward.1} parent=0 // pred_region
    _
  $region13: #{rnn_wrapper_forward.1} parent=0 // pred_fallthru
    _
  // Predicated region
  $region14: #{rnn_wrapper_forward.1} parent=0 // pred_check
    _
  $region15: #{rnn_wrapper_forward.1} parent=0 // pred_check_branch
    %17 = sbr.rel (0) target = $region17
  $region16: #{rnn_wrapper_forward.1} parent=0 // pred_region
    _
  $region17: #{rnn_wrapper_forward.1} parent=0 // pred_fallthru
    _
  // Predicated region
  $region18: #{rnn_wrapper_forward.1} parent=0 // pred_check
    _
  $region19: #{rnn_wrapper_forward.1} parent=0 // pred_check_branch
    %19 = sbr.rel (0) target = $region21
  $region20: #{rnn_wrapper_forward.1} parent=0 // pred_region
    _
  $region21: #{rnn_wrapper_forward.1} parent=0 // pred_fallthru
    _
  %v20 = vld [vmem:[%s0] sm:$0xff]
  %v21 = vld [vmem:[%s0 + $0x8] sm:$0xff]
  %v22 = vld [vmem:[%s0 + $0x10] sm:$0xff]
  %v23 = vld [vmem:[%s0 + $0x18] sm:$0xff]
  %v24 = vld [vmem:[%s0 + $0x20] sm:$0xff]
  %v25 = vld [vmem:[%s0 + $0x28] sm:$0xff]
  %v26 = vld [vmem:[%s0 + $0x30] sm:$0xff]
  %v27 = vld [vmem:[%s0 + $0x38] sm:$0xff]
  %v28 = vld [vmem:[%s2] sm:$0xff]
  %v29 = vld [vmem:[%s2 + $0x8] sm:$0xff]
  %v30 = vld [vmem:[%s4] sm:$0x1]
  %v32 = vperm.slane %v30, 0
  %vm34 = vcmask 130048
  %v36 = vsel %vm34, %v20, 0
  %v39 = vsel %vm34, %v21, 0
  %v42 = vsel %vm34, %v22, 0
  %v45 = vsel %vm34, %v23, 0
  %v48 = vsel %vm34, %v24, 0
  %v51 = vsel %vm34, %v25, 0
  %v54 = vsel %vm34, %v26, 0
  %v57 = vsel %vm34, %v27, 0
  %59 = vmatpush.msra.mxu0 0.0
  %60 = vmatpush.msra.mxu0 0.0
  %61 = vmatpush.msra.mxu0 0.0
  %62 = vmatpush.msra.mxu0 0.0
  %63 = vmatpush.msra.mxu0 0.0
  %64 = vmatpush.msra.mxu0 0.0
  %65 = vmatpush.msra.mxu0 0.0
  %66 = vmatpush.msra.mxu0 0.0
  %67 = vmatpush.msra.mxu0 0.0
  %68 = vmatpush.msra.mxu0 0.0
  %69 = vmatpush.msra.mxu0 0.0
  %70 = vmatpush.msra.mxu0 0.0
  %71 = vmatpush.msra.mxu0 0.0
  %72 = vmatpush.msra.mxu0 0.0
  %73 = vmatpush.msra.mxu0 %v29
  %74 = vmatpush.msra.mxu0 %v28
  %75 = vmatmul.f32.gmra.mxu0 %v36
  %v76 = vpop.f32.mrf.mxu0
  %v77 = vadd.f32 %v32, %v76
  %78 = vmatmul.f32.gmra.mxu0 %v39
  %v79 = vpop.f32.mrf.mxu0
  %v80 = vadd.f32 %v32, %v79
  %81 = vmatmul.f32.gmra.mxu0 %v42
  %v82 = vpop.f32.mrf.mxu0
  %v83 = vadd.f32 %v32, %v82
  %84 = vmatmul.f32.gmra.mxu0 %v45
  %v85 = vpop.f32.mrf.mxu0
  %v86 = vadd.f32 %v32, %v85
  %87 = vmatmul.f32.gmra.mxu0 %v48
  %v88 = vpop.f32.mrf.mxu0
  %v89 = vadd.f32 %v32, %v88
  %90 = vmatmul.f32.gmra.mxu0 %v51
  %v91 = vpop.f32.mrf.mxu0
  %v92 = vadd.f32 %v32, %v91
  %93 = vmatmul.f32.gmra.mxu0 %v54
  %v94 = vpop.f32.mrf.mxu0
  %v95 = vadd.f32 %v32, %v94
  %96 = vmatmul.f32.gmra.mxu0 %v57
  %v97 = vpop.f32.mrf.mxu0
  %v98 = vadd.f32 %v32, %v97
  %99 = vdwg.mxu0
  %vm100 = vcmask 261120
  %101 = vst.msk [vmem:[#allocation2] sm:$0xff] %vm100, %v77
  %102 = vst.msk [vmem:[#allocation2 + $0x8] sm:$0xff] %vm100, %v80
  %103 = vst.msk [vmem:[#allocation2 + $0x10] sm:$0xff] %vm100, %v83
  %104 = vst.msk [vmem:[#allocation2 + $0x18] sm:$0xff] %vm100, %v86
  %105 = vst.msk [vmem:[#allocation2 + $0x20] sm:$0xff] %vm100, %v89
  %106 = vst.msk [vmem:[#allocation2 + $0x28] sm:$0xff] %vm100, %v92
  %107 = vst.msk [vmem:[#allocation2 + $0x30] sm:$0xff] %vm100, %v95
  %108 = vst.msk [vmem:[#allocation2 + $0x38] sm:$0xff] %vm100, %v98
  %109 = vst.msk [vmem:[#allocation3] sm:$0xff] %vm100, 0.0
  %v110 = vld [vmem:[#allocation2] sm:$0xff]
  %v111 = vld [vmem:[#allocation3] sm:$0xff]
  %v112 = vld [vmem:[%s3] sm:$0xff]
  %v113 = vld [vmem:[%s3 + $0x8] sm:$0xff]
  %v114 = vld [vmem:[%s3 + $0x10] sm:$0xff]
  %v115 = vld [vmem:[%s3 + $0x18] sm:$0xff]
  %v117 = vsel %vm100, %v111, 0
  %119 = vmatpush.msra.mxu0 0.0
  %120 = vmatpush.msra.mxu0 0.0
  %121 = vmatpush.msra.mxu0 0.0
  %122 = vmatpush.msra.mxu0 0.0
  %123 = vmatpush.msra.mxu0 0.0
  %124 = vmatpush.msra.mxu0 0.0
  %125 = vmatpush.msra.mxu0 0.0
  %126 = vmatpush.msra.mxu0 0.0
  %127 = vmatpush.msra.mxu0 0.0
  %128 = vmatpush.msra.mxu0 0.0
  %129 = vmatpush.msra.mxu0 0.0
  %130 = vmatpush.msra.mxu0 0.0
  %131 = vmatpush.msra.mxu0 %v115
  %132 = vmatpush.msra.mxu0 %v114
  %133 = vmatpush.msra.mxu0 %v113
  %134 = vmatpush.msra.mxu0 %v112
  %135 = vmatmul.f32.gmra.mxu0 %v117
  %v136 = vpop.f32.mrf.mxu0
  %v137 = vadd.f32 0.0, %v136
  %138 = vdwg.mxu0
  %v139 = vadd.f32 %v110, %v137
  %v140 = vtanh.pop %v139
  %141 = vst.msk [vmem:[#allocation3] sm:$0xff] %vm100, %v140
  %142 = vst.msk [vmem:[#allocation2] sm:$0xff] %vm100, %v140
  %v143 = vld [vmem:[#allocation2 + $0x8] sm:$0xff]
  %v144 = vld [vmem:[#allocation3] sm:$0xff]
  %v145 = vld [vmem:[%s3] sm:$0xff]
  %v146 = vld [vmem:[%s3 + $0x8] sm:$0xff]
  %v147 = vld [vmem:[%s3 + $0x10] sm:$0xff]
  %v148 = vld [vmem:[%s3 + $0x18] sm:$0xff]
  %v150 = vsel %vm100, %v144, 0
  %152 = vmatpush.msra.mxu0 0.0
  %153 = vmatpush.msra.mxu0 0.0
  %154 = vmatpush.msra.mxu0 0.0
  %155 = vmatpush.msra.mxu0 0.0
  %156 = vmatpush.msra.mxu0 0.0
  %157 = vmatpush.msra.mxu0 0.0
  %158 = vmatpush.msra.mxu0 0.0
  %159 = vmatpush.msra.mxu0 0.0
  %160 = vmatpush.msra.mxu0 0.0
  %161 = vmatpush.msra.mxu0 0.0
  %162 = vmatpush.msra.mxu0 0.0
  %163 = vmatpush.msra.mxu0 0.0
  %164 = vmatpush.msra.mxu0 %v148
  %165 = vmatpush.msra.mxu0 %v147
  %166 = vmatpush.msra.mxu0 %v146
  %167 = vmatpush.msra.mxu0 %v145
  %168 = vmatmul.f32.gmra.mxu0 %v150
  %v169 = vpop.f32.mrf.mxu0
  %v170 = vadd.f32 0.0, %v169
  %171 = vdwg.mxu0
  %v172 = vadd.f32 %v143, %v170
  %v173 = vtanh.pop %v172
  %174 = vst.msk [vmem:[#allocation3] sm:$0xff] %vm100, %v173
  %175 = vst.msk [vmem:[#allocation2 + $0x8] sm:$0xff] %vm100, %v173
  %v176 = vld [vmem:[#allocation2 + $0x10] sm:$0xff]
  %v177 = vld [vmem:[#allocation3] sm:$0xff]
  %v178 = vld [vmem:[%s3] sm:$0xff]
  %v179 = vld [vmem:[%s3 + $0x8] sm:$0xff]
  %v180 = vld [vmem:[%s3 + $0x10] sm:$0xff]
  %v181 = vld [vmem:[%s3 + $0x18] sm:$0xff]
  %v183 = vsel %vm100, %v177, 0
  %185 = vmatpush.msra.mxu0 0.0
  %186 = vmatpush.msra.mxu0 0.0
  %187 = vmatpush.msra.mxu0 0.0
  %188 = vmatpush.msra.mxu0 0.0
  %189 = vmatpush.msra.mxu0 0.0
  %190 = vmatpush.msra.mxu0 0.0
  %191 = vmatpush.msra.mxu0 0.0
  %192 = vmatpush.msra.mxu0 0.0
  %193 = vmatpush.msra.mxu0 0.0
  %194 = vmatpush.msra.mxu0 0.0
  %195 = vmatpush.msra.mxu0 0.0
  %196 = vmatpush.msra.mxu0 0.0
  %197 = vmatpush.msra.mxu0 %v181
  %198 = vmatpush.msra.mxu0 %v180
  %199 = vmatpush.msra.mxu0 %v179
  %200 = vmatpush.msra.mxu0 %v178
  %201 = vmatmul.f32.gmra.mxu0 %v183
  %v202 = vpop.f32.mrf.mxu0
  %v203 = vadd.f32 0.0, %v202
  %204 = vdwg.mxu0
  %v205 = vadd.f32 %v176, %v203
  %v206 = vtanh.pop %v205
  %207 = vst.msk [vmem:[#allocation3] sm:$0xff] %vm100, %v206
  %208 = vst.msk [vmem:[#allocation2 + $0x10] sm:$0xff] %vm100, %v206
  %v209 = vld [vmem:[#allocation2 + $0x18] sm:$0xff]
  %v210 = vld [vmem:[#allocation3] sm:$0xff]
  %v211 = vld [vmem:[%s3] sm:$0xff]
  %v212 = vld [vmem:[%s3 + $0x8] sm:$0xff]
  %v213 = vld [vmem:[%s3 + $0x10] sm:$0xff]
  %v214 = vld [vmem:[%s3 + $0x18] sm:$0xff]
  %v216 = vsel %vm100, %v210, 0
  %218 = vmatpush.msra.mxu0 0.0
  %219 = vmatpush.msra.mxu0 0.0
  %220 = vmatpush.msra.mxu0 0.0
  %221 = vmatpush.msra.mxu0 0.0
  %222 = vmatpush.msra.mxu0 0.0
  %223 = vmatpush.msra.mxu0 0.0
  %224 = vmatpush.msra.mxu0 0.0
  %225 = vmatpush.msra.mxu0 0.0
  %226 = vmatpush.msra.mxu0 0.0
  %227 = vmatpush.msra.mxu0 0.0
  %228 = vmatpush.msra.mxu0 0.0
  %229 = vmatpush.msra.mxu0 0.0
  %230 = vmatpush.msra.mxu0 %v214
  %231 = vmatpush.msra.mxu0 %v213
  %232 = vmatpush.msra.mxu0 %v212
  %233 = vmatpush.msra.mxu0 %v211
  %234 = vmatmul.f32.gmra.mxu0 %v216
  %v235 = vpop.f32.mrf.mxu0
  %v236 = vadd.f32 0.0, %v235
  %237 = vdwg.mxu0
  %v238 = vadd.f32 %v209, %v236
  %v239 = vtanh.pop %v238
  %240 = vst.msk [vmem:[#allocation3] sm:$0xff] %vm100, %v239
  %241 = vst.msk [vmem:[#allocation2 + $0x18] sm:$0xff] %vm100, %v239
  %v242 = vld [vmem:[#allocation2 + $0x20] sm:$0xff]
  %v243 = vld [vmem:[#allocation3] sm:$0xff]
  %v244 = vld [vmem:[%s3] sm:$0xff]
  %v245 = vld [vmem:[%s3 + $0x8] sm:$0xff]
  %v246 = vld [vmem:[%s3 + $0x10] sm:$0xff]
  %v247 = vld [vmem:[%s3 + $0x18] sm:$0xff]
  %v249 = vsel %vm100, %v243, 0
  %251 = vmatpush.msra.mxu0 0.0
  %252 = vmatpush.msra.mxu0 0.0
  %253 = vmatpush.msra.mxu0 0.0
  %254 = vmatpush.msra.mxu0 0.0
  %255 = vmatpush.msra.mxu0 0.0
  %256 = vmatpush.msra.mxu0 0.0
  %257 = vmatpush.msra.mxu0 0.0
  %258 = vmatpush.msra.mxu0 0.0
  %259 = vmatpush.msra.mxu0 0.0
  %260 = vmatpush.msra.mxu0 0.0
  %261 = vmatpush.msra.mxu0 0.0
  %262 = vmatpush.msra.mxu0 0.0
  %263 = vmatpush.msra.mxu0 %v247
  %264 = vmatpush.msra.mxu0 %v246
  %265 = vmatpush.msra.mxu0 %v245
  %266 = vmatpush.msra.mxu0 %v244
  %267 = vmatmul.f32.gmra.mxu0 %v249
  %v268 = vpop.f32.mrf.mxu0
  %v269 = vadd.f32 0.0, %v268
  %270 = vdwg.mxu0
  %v271 = vadd.f32 %v242, %v269
  %v272 = vtanh.pop %v271
  %273 = vst.msk [vmem:[#allocation3] sm:$0xff] %vm100, %v272
  %274 = vst.msk [vmem:[#allocation2 + $0x20] sm:$0xff] %vm100, %v272
  %v275 = vld [vmem:[#allocation2 + $0x28] sm:$0xff]
  %v276 = vld [vmem:[#allocation3] sm:$0xff]
  %v277 = vld [vmem:[%s3] sm:$0xff]
  %v278 = vld [vmem:[%s3 + $0x8] sm:$0xff]
  %v279 = vld [vmem:[%s3 + $0x10] sm:$0xff]
  %v280 = vld [vmem:[%s3 + $0x18] sm:$0xff]
  %v282 = vsel %vm100, %v276, 0
  %284 = vmatpush.msra.mxu0 0.0
  %285 = vmatpush.msra.mxu0 0.0
  %286 = vmatpush.msra.mxu0 0.0
  %287 = vmatpush.msra.mxu0 0.0
  %288 = vmatpush.msra.mxu0 0.0
  %289 = vmatpush.msra.mxu0 0.0
  %290 = vmatpush.msra.mxu0 0.0
  %291 = vmatpush.msra.mxu0 0.0
  %292 = vmatpush.msra.mxu0 0.0
  %293 = vmatpush.msra.mxu0 0.0
  %294 = vmatpush.msra.mxu0 0.0
  %295 = vmatpush.msra.mxu0 0.0
  %296 = vmatpush.msra.mxu0 %v280
  %297 = vmatpush.msra.mxu0 %v279
  %298 = vmatpush.msra.mxu0 %v278
  %299 = vmatpush.msra.mxu0 %v277
  %300 = vmatmul.f32.gmra.mxu0 %v282
  %v301 = vpop.f32.mrf.mxu0
  %v302 = vadd.f32 0.0, %v301
  %303 = vdwg.mxu0
  %v304 = vadd.f32 %v275, %v302
  %v305 = vtanh.pop %v304
  %306 = vst.msk [vmem:[#allocation3] sm:$0xff] %vm100, %v305
  %307 = vst.msk [vmem:[#allocation2 + $0x28] sm:$0xff] %vm100, %v305
  %v308 = vld [vmem:[#allocation2 + $0x30] sm:$0xff]
  %v309 = vld [vmem:[#allocation3] sm:$0xff]
  %v310 = vld [vmem:[%s3] sm:$0xff]
  %v311 = vld [vmem:[%s3 + $0x8] sm:$0xff]
  %v312 = vld [vmem:[%s3 + $0x10] sm:$0xff]
  %v313 = vld [vmem:[%s3 + $0x18] sm:$0xff]
  %v315 = vsel %vm100, %v309, 0
  %317 = vmatpush.msra.mxu0 0.0
  %318 = vmatpush.msra.mxu0 0.0
  %319 = vmatpush.msra.mxu0 0.0
  %320 = vmatpush.msra.mxu0 0.0
  %321 = vmatpush.msra.mxu0 0.0
  %322 = vmatpush.msra.mxu0 0.0
  %323 = vmatpush.msra.mxu0 0.0
  %324 = vmatpush.msra.mxu0 0.0
  %325 = vmatpush.msra.mxu0 0.0
  %326 = vmatpush.msra.mxu0 0.0
  %327 = vmatpush.msra.mxu0 0.0
  %328 = vmatpush.msra.mxu0 0.0
  %329 = vmatpush.msra.mxu0 %v313
  %330 = vmatpush.msra.mxu0 %v312
  %331 = vmatpush.msra.mxu0 %v311
  %332 = vmatpush.msra.mxu0 %v310
  %333 = vmatmul.f32.gmra.mxu0 %v315
  %v334 = vpop.f32.mrf.mxu0
  %v335 = vadd.f32 0.0, %v334
  %336 = vdwg.mxu0
  %v337 = vadd.f32 %v308, %v335
  %v338 = vtanh.pop %v337
  %339 = vst.msk [vmem:[#allocation3] sm:$0xff] %vm100, %v338
  %340 = vst.msk [vmem:[#allocation2 + $0x30] sm:$0xff] %vm100, %v338
  %v341 = vld [vmem:[#allocation2 + $0x38] sm:$0xff]
  %v342 = vld [vmem:[#allocation3] sm:$0xff]
  %v343 = vld [vmem:[%s3] sm:$0xff]
  %v344 = vld [vmem:[%s3 + $0x8] sm:$0xff]
  %v345 = vld [vmem:[%s3 + $0x10] sm:$0xff]
  %v346 = vld [vmem:[%s3 + $0x18] sm:$0xff]
  %v348 = vsel %vm100, %v342, 0
  %350 = vmatpush.msra.mxu0 0.0
  %351 = vmatpush.msra.mxu0 0.0
  %352 = vmatpush.msra.mxu0 0.0
  %353 = vmatpush.msra.mxu0 0.0
  %354 = vmatpush.msra.mxu0 0.0
  %355 = vmatpush.msra.mxu0 0.0
  %356 = vmatpush.msra.mxu0 0.0
  %357 = vmatpush.msra.mxu0 0.0
  %358 = vmatpush.msra.mxu0 0.0
  %359 = vmatpush.msra.mxu0 0.0
  %360 = vmatpush.msra.mxu0 0.0
  %361 = vmatpush.msra.mxu0 0.0
  %362 = vmatpush.msra.mxu0 %v346
  %363 = vmatpush.msra.mxu0 %v345
  %364 = vmatpush.msra.mxu0 %v344
  %365 = vmatpush.msra.mxu0 %v343
  %366 = vmatmul.f32.gmra.mxu0 %v348
  %v367 = vpop.f32.mrf.mxu0
  %v368 = vadd.f32 0.0, %v367
  %369 = vdwg.mxu0
  %v370 = vadd.f32 %v341, %v368
  %v371 = vtanh.pop %v370
  %372 = vst.msk [vmem:[#allocation3] sm:$0xff] %vm100, %v371
  %373 = vst.msk [vmem:[#allocation2 + $0x38] sm:$0xff] %vm100, %v371
  %v374 = vld [vmem:[#allocation2] sm:$0xff]
  %v375 = vld [vmem:[#allocation2 + $0x8] sm:$0xff]
  %v376 = vld [vmem:[#allocation2 + $0x10] sm:$0xff]
  %v377 = vld [vmem:[#allocation2 + $0x18] sm:$0xff]
  %v378 = vld [vmem:[#allocation2 + $0x20] sm:$0xff]
  %v379 = vld [vmem:[#allocation2 + $0x28] sm:$0xff]
  %v380 = vld [vmem:[#allocation2 + $0x30] sm:$0xff]
  %v381 = vld [vmem:[#allocation2 + $0x38] sm:$0xff]
  %v382 = vld [vmem:[%s1] sm:$0xff]
  %v383 = vld [vmem:[%s1 + $0x8] sm:$0xff]
  %v384 = vld [vmem:[%s1 + $0x10] sm:$0xff]
  %v385 = vld [vmem:[%s1 + $0x18] sm:$0xff]
  %v386 = vld [vmem:[%s1 + $0x20] sm:$0xff]
  %v387 = vld [vmem:[%s1 + $0x28] sm:$0xff]
  %v388 = vld [vmem:[%s1 + $0x30] sm:$0xff]
  %v389 = vld [vmem:[%s1 + $0x38] sm:$0xff]
  %391 = vset.pattern.permute.xlu0 0
  %392 = vperm.xlu0 %391, %v382
  %v393 = vpop.permute.xlu0 %392
  %396 = vset.pattern.permute.xlu0 0
  %397 = vperm.xlu0 %396, %v383
  %v398 = vpop.permute.xlu0 %397
  %401 = vset.pattern.permute.xlu0 0
  %402 = vperm.xlu0 %401, %v384
  %v403 = vpop.permute.xlu0 %402
  %406 = vset.pattern.permute.xlu0 0
  %407 = vperm.xlu0 %406, %v385
  %v408 = vpop.permute.xlu0 %407
  %411 = vset.pattern.permute.xlu0 0
  %412 = vperm.xlu0 %411, %v386
  %v413 = vpop.permute.xlu0 %412
  %416 = vset.pattern.permute.xlu0 0
  %417 = vperm.xlu0 %416, %v387
  %v418 = vpop.permute.xlu0 %417
  %421 = vset.pattern.permute.xlu0 0
  %422 = vperm.xlu0 %421, %v388
  %v423 = vpop.permute.xlu0 %422
  %426 = vset.pattern.permute.xlu0 0
  %427 = vperm.xlu0 %426, %v389
  %v428 = vpop.permute.xlu0 %427
  %v430 = vmul.f32 %v374, %v393
  %v431 = vmul.f32 %v375, %v398
  %v432 = vmul.f32 %v376, %v403
  %v433 = vmul.f32 %v377, %v408
  %v434 = vmul.f32 %v378, %v413
  %v435 = vmul.f32 %v379, %v418
  %v436 = vmul.f32 %v380, %v423
  %v437 = vmul.f32 %v381, %v428
  %438 = vst.msk [vmem:[%s5] sm:$0xff] %vm100, %v430
  %439 = vst.msk [vmem:[%s5 + $0x8] sm:$0xff] %vm100, %v431
  %440 = vst.msk [vmem:[%s5 + $0x10] sm:$0xff] %vm100, %v432
  %441 = vst.msk [vmem:[%s5 + $0x18] sm:$0xff] %vm100, %v433
  %442 = vst.msk [vmem:[%s5 + $0x20] sm:$0xff] %vm100, %v434
  %443 = vst.msk [vmem:[%s5 + $0x28] sm:$0xff] %vm100, %v435
  %444 = vst.msk [vmem:[%s5 + $0x30] sm:$0xff] %vm100, %v436
  %445 = vst.msk [vmem:[%s5 + $0x38] sm:$0xff] %vm100, %v437
  // Predicated region
  $region22: #{rnn_wrapper_forward.1} parent=0 // pred_check
    _
  $region23: #{rnn_wrapper_forward.1} parent=0 // pred_check_branch
    %447 = sbr.rel (0) target = $region25
  $region24: #{rnn_wrapper_forward.1} parent=0 // pred_region
    _
  $region25: #{rnn_wrapper_forward.1} parent=0 // pred_fallthru
    _
  // Predicated region
  $region26: #{rnn_wrapper_forward.1} parent=0 // pred_check
    _
  $region27: #{rnn_wrapper_forward.1} parent=0 // pred_check_branch
    %449 = sbr.rel (0) target = $region29
  $region28: #{rnn_wrapper_forward.1} parent=0 // pred_region
    _
  $region29: #{rnn_wrapper_forward.1} parent=0 // pred_fallthru
    _

</llo_original>
